<compile_context>
chip_gen: v7x
topology: tpu7x:2x2x1
jax: 0.10.0
libtpu: 0.0.40
codegen_flags: <defaults>
</compile_context>

<pallas_src>
import jax
import jax.numpy as jnp
from jax import lax
from jax.experimental import pallas as pl
from jax.experimental.pallas import tpu as pltpu


def _round_up(x, m):
    return (x + m - 1) // m * m


def _make_chain_kernel(num_layers):
    """Kernel: x_ref, w_ref_0, ..., w_ref_{L-1}, o_ref."""

    def kernel(x_ref, *rest):
        o_ref = rest[num_layers]
        x = x_ref[...]
        for l in range(num_layers):          # static unroll over layers
            w = rest[l][...]                 # (out_p, in_p), PyTorch layout
            # y = x @ W^T : contract x axis 1 against W axis 1 (in_features).
            # The MXU consumes the transposed-RHS contraction natively;
            # f32 accumulation.
            x = lax.dot_general(
                x, w,
                dimension_numbers=(((1,), (1,)), ((), ())),
                preferred_element_type=jnp.float32,
            )
        o_ref[...] = x.astype(o_ref.dtype)

    return kernel


def linear_nn_forward(x, weights, *, use_bf16=False, tile_m=512):
    """Forward pass of linearNN: inp_layer -> hidden layers -> out_layer.

    x:       (batch, inp_size)
    weights: PyTorch-layout (out_features, in_features) matrices in application
             order [inp_layer, *hidden_layers, out_layer].
    use_bf16: feed the MXU bf16 operands (f32 accumulate).  Off by default for
              exact f32 parity with the PyTorch module.
    """
    batch, inp_size = x.shape
    out_size = weights[-1].shape[0]
    num_layers = len(weights)

    compute_dtype = jnp.bfloat16 if use_bf16 else x.dtype

    # --- Lane-dense padding ---------------------------------------------------
    k0p = _round_up(inp_size, 128)            # contraction dim of first layer
    np_ = _round_up(out_size, 128)            # lane-dense output -> unmasked vst
    tm = min(tile_m, _round_up(batch, 8))     # batch tile (multiple of 8 sublanes)
    mp = _round_up(batch, tm)

    x_p = jnp.zeros((mp, k0p), compute_dtype).at[:batch, :inp_size].set(
        x.astype(compute_dtype))

    w_ps = []
    for w in weights:
        o, i = w.shape
        pout, pin = _round_up(o, 128), _round_up(i, 128)
        w_ps.append(
            jnp.zeros((pout, pin), compute_dtype).at[:o, :i].set(
                w.astype(compute_dtype)))

    # --- VMEM budget: resident weights + double-buffered x/out tiles ----------
    # TODO(synk): if the weight stack ever exceeds VMEM, fall back to tiling
    # the widest layer along its contraction dim instead of keeping all
    # weights resident.
    itemsize = jnp.dtype(compute_dtype).itemsize
    out_itemsize = jnp.dtype(x.dtype).itemsize
    w_bytes = sum(wp.size * itemsize for wp in w_ps)
    max_feat = max([k0p, np_] + [wp.shape[0] for wp in w_ps])
    act_bytes = (2 * tm * k0p * itemsize            # double-buffered x tiles
                 + 2 * tm * np_ * out_itemsize      # double-buffered out tiles
                 + 2 * tm * max_feat * 4)           # f32 intermediates headroom
    vmem_limit = min(64 * 1024 * 1024,
                     max(32 * 1024 * 1024, int((w_bytes + act_bytes) * 3 // 2)))

    in_specs = [pl.BlockSpec((tm, k0p), lambda i: (i, 0))]   # batch-tiled acts
    for wp in w_ps:
        # Full-block, constant index_map -> VMEM-resident across batch tiles.
        in_specs.append(pl.BlockSpec(wp.shape, lambda i: (0, 0)))

    out_p = pl.pallas_call(
        _make_chain_kernel(num_layers),
        out_shape=jax.ShapeDtypeStruct((mp, np_), x.dtype),
        grid=(mp // tm,),
        in_specs=in_specs,
        out_specs=pl.BlockSpec((tm, np_), lambda i: (i, 0)),
        compiler_params=pltpu.CompilerParams(
            dimension_semantics=("parallel",),
            vmem_limit_bytes=vmem_limit,
        ),
    )(x_p, *w_ps)

    return out_p[:batch, :out_size]


def make_weights(key, inp_size, out_size, widths):
    """Deterministic synthetic parameters matching linearNN.__init__ shapes.

    Returns PyTorch-layout (out_features, in_features) matrices in order:
      inp_layer, layers[0..len(widths)-2], out_layer
    """
    shapes = [(widths[0], inp_size)]
    for i in range(1, len(widths)):
        shapes.append((widths[i], widths[i - 1]))
    shapes.append((out_size, widths[-1]))

    weights = []
    for shape in shapes:
        key, sub = jax.random.split(key)
        scale = jnp.sqrt(2.0 / (shape[0] + shape[1]))  # Xavier-ish, deterministic
        weights.append(scale * jax.random.normal(sub, shape, dtype=jnp.float32))
    return weights


if __name__ == "__main__":
    # Small shapes consistent with the module: batch=2, inp=16, widths=[32, 32], out=8
    batch, inp_size, out_size = 2, 16, 8
    widths = [32, 32]

    key = jax.random.PRNGKey(0)
    key, xk = jax.random.split(key)
    x = jax.random.normal(xk, (batch, inp_size), dtype=jnp.float32)

    weights = make_weights(key, inp_size, out_size, widths)

    out = linear_nn_forward(x, weights)
    out = jax.block_until_ready(out)

    # Reference: per-layer chain exactly as the PyTorch forward.
    ref = x
    for w in weights:
        ref = ref @ w.T
    assert out.shape == (batch, out_size)
    assert jnp.allclose(out, ref, atol=1e-4, rtol=1e-4), "mismatch vs reference"

    print("KERNEL_OK")
</pallas_src>

<mosaic_0001>
module attributes {stable_mosaic.version = 11 : i64} {
  func.func @kernel(%arg0: i32, %arg1: memref<8x128xf32, #tpu.memory_space<vmem>>, %arg2: memref<128x128xf32, #tpu.memory_space<vmem>>, %arg3: memref<128x128xf32, #tpu.memory_space<vmem>>, %arg4: memref<128x128xf32, #tpu.memory_space<vmem>>, %arg5: memref<8x128xf32, #tpu.memory_space<vmem>>) attributes {dimension_semantics = [#tpu.dimension_semantics<parallel>], iteration_bounds = array<i64: 1>, scalar_prefetch = 0 : i64, scratch_operands = 0 : i64, tpu.core_type = #tpu.core_type<tc>, window_params = [{transform_indices = @transform_0, window_bounds = array<i64: 8, 128>}, {pipeline_mode = #tpu.pipeline_mode<synchronous>, transform_indices = @transform_1, window_bounds = array<i64: 128, 128>}, {pipeline_mode = #tpu.pipeline_mode<synchronous>, transform_indices = @transform_2, window_bounds = array<i64: 128, 128>}, {pipeline_mode = #tpu.pipeline_mode<synchronous>, transform_indices = @transform_3, window_bounds = array<i64: 128, 128>}, {transform_indices = @transform_4, window_bounds = array<i64: 8, 128>}]} {
    %c0 = arith.constant 0 : index
    %c0_0 = arith.constant 0 : index
    %0 = vector.load %arg1[%c0, %c0_0] : memref<8x128xf32, #tpu.memory_space<vmem>>, vector<8x128xf32>
    %c0_1 = arith.constant 0 : index
    %c0_2 = arith.constant 0 : index
    %1 = vector.load %arg2[%c0_1, %c0_2] : memref<128x128xf32, #tpu.memory_space<vmem>>, vector<128x128xf32>
    %cst = arith.constant dense<0.000000e+00> : vector<8x128xf32>
    %2 = tpu.matmul %0, %1, %cst {dimension_numbers = #tpu.dot_dimension_numbers<[1], [1], [0], [0], [0, 0, 1, 0], [], []>} : vector<8x128xf32>, vector<128x128xf32>, vector<8x128xf32> -> vector<8x128xf32>
    %c0_3 = arith.constant 0 : index
    %c0_4 = arith.constant 0 : index
    %3 = vector.load %arg3[%c0_3, %c0_4] : memref<128x128xf32, #tpu.memory_space<vmem>>, vector<128x128xf32>
    %cst_5 = arith.constant dense<0.000000e+00> : vector<8x128xf32>
    %4 = tpu.matmul %2, %3, %cst_5 {dimension_numbers = #tpu.dot_dimension_numbers<[1], [1], [0], [0], [0, 0, 1, 0], [], []>} : vector<8x128xf32>, vector<128x128xf32>, vector<8x128xf32> -> vector<8x128xf32>
    %c0_6 = arith.constant 0 : index
    %c0_7 = arith.constant 0 : index
    %5 = vector.load %arg4[%c0_6, %c0_7] : memref<128x128xf32, #tpu.memory_space<vmem>>, vector<128x128xf32>
    %cst_8 = arith.constant dense<0.000000e+00> : vector<8x128xf32>
    %6 = tpu.matmul %4, %5, %cst_8 {dimension_numbers = #tpu.dot_dimension_numbers<[1], [1], [0], [0], [0, 0, 1, 0], [], []>} : vector<8x128xf32>, vector<128x128xf32>, vector<8x128xf32> -> vector<8x128xf32>
    %c0_9 = arith.constant 0 : index
    %c0_10 = arith.constant 0 : index
    %7 = vector.load %arg5[%c0_9, %c0_10] : memref<8x128xf32, #tpu.memory_space<vmem>>, vector<8x128xf32>
    tpu.vector_store %arg5[%c0_9, %c0_10], %6 {strides = array<i32>} : memref<8x128xf32, #tpu.memory_space<vmem>>, vector<8x128xf32>,
    return
  }
  func.func @transform_0(%arg0: i32) -> (i32, i32) {
    %c0_i32 = arith.constant 0 : i32
    %c0_i32_0 = arith.constant 0 : i32
    return %arg0, %c0_i32 : i32, i32
  }
  func.func @transform_1(%arg0: i32) -> (i32, i32) {
    %c0_i32 = arith.constant 0 : i32
    %c0_i32_0 = arith.constant 0 : i32
    %c0_i32_1 = arith.constant 0 : i32
    return %c0_i32, %c0_i32_0 : i32, i32
  }
  func.func @transform_2(%arg0: i32) -> (i32, i32) {
    %c0_i32 = arith.constant 0 : i32
    %c0_i32_0 = arith.constant 0 : i32
    %c0_i32_1 = arith.constant 0 : i32
    return %c0_i32, %c0_i32_0 : i32, i32
  }
  func.func @transform_3(%arg0: i32) -> (i32, i32) {
    %c0_i32 = arith.constant 0 : i32
    %c0_i32_0 = arith.constant 0 : i32
    %c0_i32_1 = arith.constant 0 : i32
    return %c0_i32, %c0_i32_0 : i32, i32
  }
  func.func @transform_4(%arg0: i32) -> (i32, i32) {
    %c0_i32 = arith.constant 0 : i32
    %c0_i32_0 = arith.constant 0 : i32
    return %arg0, %c0_i32 : i32, i32
  }
}

</mosaic_0001>

<llo_original>
// kernel: tpu_custom_call.1
$region0: #{tpu_custom_call.1}
  #allocation0 [shape = 'u32[]', space=smem, size = 0x4, offset = 0x4, fixed_abs, tag = 'smem constant byte address 0x4 - core index']
  #allocation1 [shape = 'u32[144,128]{1,0:T(1,128)}', space=vmem, size = 0x12000, scoped, tag = 'internal scratch']
  %s0 = inlined_call_operand.hbm [shape: f32[8,128], index: 0, kind: input, shape index: {}]
  %s1 = inlined_call_operand.hbm [shape: f32[128,128], index: 1, kind: input, shape index: {}]
  %s2 = inlined_call_operand.hbm [shape: f32[128,128], index: 2, kind: input, shape index: {}]
  %s3 = inlined_call_operand.hbm [shape: f32[128,128], index: 3, kind: input, shape index: {}]
  %s4 = inlined_call_operand.hbm [shape: f32[8,128], index: 4, kind: output, shape index: {}]
  %s5 = sld [smem:[#allocation0]]
  $region42: #{tpu_custom_call.1} parent=0
    _
  %s7 = ssub.s32 1, %s5
  %s8 = scalar_select 0, %s7, %s5
  $region1: #{tpu_custom_call.1} parent=0
    #allocation2 [shape = 'u8[4096]{0}', space=vmem, size = 0x1000, scoped, tag = 'input window, operand 0, single buffered']
    #allocation3 [shape = 's32[1]{0}', space=sflag, size = 0x4, scoped, tag = 'scoped memory for tpu_custom_call.1']
    #allocation4 [shape = 's32[1]{0}', space=sflag, size = 0x4, scoped, tag = 'scoped memory for tpu_custom_call.1']
    #allocation5 [shape = 'u8[65536]{0}', space=vmem, size = 0x10000, scoped, tag = 'input window, operand 1, single buffered']
    #allocation6 [shape = 's32[1]{0}', space=sflag, size = 0x4, scoped, tag = 'scoped memory for tpu_custom_call.1']
    #allocation7 [shape = 'u8[65536]{0}', space=vmem, size = 0x10000, scoped, tag = 'input window, operand 2, single buffered']
    #allocation8 [shape = 'u8[65536]{0}', space=vmem, size = 0x10000, scoped, tag = 'input window, operand 3, single buffered']
    #allocation9 [shape = 's32[1]{0}', space=sflag, size = 0x4, scoped, tag = 'scoped memory for tpu_custom_call.1']
    #allocation10 [shape = 'u8[4096]{0}', space=vmem, size = 0x1000, scoped, tag = 'output window, operand 0, single buffered']
    %9 = vsyncpa [#allocation3], 0
    %10 = vsyncpa [#allocation6], 0
    %11 = vsyncpa [#allocation9], 0
    %12 = vsyncpa [#allocation4], 0
    // Predicated region
    $region2: #{tpu_custom_call.1} parent=1 // pred_check
      _
    $region3: #{tpu_custom_call.1} parent=1 // pred_check_branch
      %14 = sbr.rel (0) target = $region5
    $region4: #{tpu_custom_call.1} parent=1 // pred_region
      %s16 = ssub.s32 128, 128
      %17 = vsyncadd [#allocation3], %s16
      %s19 = sshll.u32 [#allocation2], 4
      %s20 = int_to_ptr.vmem [resolvable:$true] %s19
      %22 = dma.hbm_to_vmem [thread:$0]  %s0, 128, %s20, [#allocation3]
    $region5: #{tpu_custom_call.1} parent=1 // pred_fallthru
      _
    // Predicated region
    $region6: #{tpu_custom_call.1} parent=1 // pred_check
      _
    $region7: #{tpu_custom_call.1} parent=1 // pred_check_branch
      %24 = sbr.rel (0) target = $region9
    $region8: #{tpu_custom_call.1} parent=1 // pred_region
      %s26 = ssub.s32 2048, 2048
      %27 = vsyncadd [#allocation6], %s26
      %s28 = sshll.u32 [#allocation5], 4
      %s29 = int_to_ptr.vmem [resolvable:$true] %s28
      %34 = dma.hbm_to_vmem [thread:$0]  %s1, 2048, %s29, [#allocation6], 128, 128, 8
    $region9: #{tpu_custom_call.1} parent=1 // pred_fallthru
      _
    // Predicated region
    $region10: #{tpu_custom_call.1} parent=1 // pred_check
      _
    $region11: #{tpu_custom_call.1} parent=1 // pred_check_branch
      %36 = sbr.rel (0) target = $region13
    $region12: #{tpu_custom_call.1} parent=1 // pred_region
      %s38 = ssub.s32 2048, 2048
      %39 = vsyncadd [#allocation6], %s38
      %s40 = sshll.u32 [#allocation7], 4
      %s41 = int_to_ptr.vmem [resolvable:$true] %s40
      %46 = dma.hbm_to_vmem [thread:$0]  %s2, 2048, %s41, [#allocation6], 128, 128, 8
    $region13: #{tpu_custom_call.1} parent=1 // pred_fallthru
      _
    // Predicated region
    $region14: #{tpu_custom_call.1} parent=1 // pred_check
      _
    $region15: #{tpu_custom_call.1} parent=1 // pred_check_branch
      %48 = sbr.rel (0) target = $region17
    $region16: #{tpu_custom_call.1} parent=1 // pred_region
      %s50 = ssub.s32 2048, 2048
      %51 = vsyncadd [#allocation9], %s50
      %s52 = sshll.u32 [#allocation8], 4
      %s53 = int_to_ptr.vmem [resolvable:$true] %s52
      %58 = dma.hbm_to_vmem [thread:$0]  %s3, 2048, %s53, [#allocation9], 128, 128, 8
    $region17: #{tpu_custom_call.1} parent=1 // pred_fallthru
      _
    // Predicated region
    $region18: #{tpu_custom_call.1} parent=1 // pred_check
      _
    $region19: #{tpu_custom_call.1} parent=1 // pred_check_branch
      %60 = sbr.rel (0) target = $region21
    $region20: #{tpu_custom_call.1} parent=1 // pred_region
      %61 = dma.done [#allocation3], 128
    $region21: #{tpu_custom_call.1} parent=1 // pred_fallthru
      _
    // Predicated region
    $region22: #{tpu_custom_call.1} parent=1 // pred_check
      _
    $region23: #{tpu_custom_call.1} parent=1 // pred_check_branch
      %63 = sbr.rel (0) target = $region25
    $region24: #{tpu_custom_call.1} parent=1 // pred_region
      %64 = dma.done [#allocation6], 2048
    $region25: #{tpu_custom_call.1} parent=1 // pred_fallthru
      _
    // Predicated region
    $region26: #{tpu_custom_call.1} parent=1 // pred_check
      _
    $region27: #{tpu_custom_call.1} parent=1 // pred_check_branch
      %66 = sbr.rel (0) target = $region29
    $region28: #{tpu_custom_call.1} parent=1 // pred_region
      %67 = dma.done [#allocation6], 2048
    $region29: #{tpu_custom_call.1} parent=1 // pred_fallthru
      _
    // Predicated region
    $region30: #{tpu_custom_call.1} parent=1 // pred_check
      _
    $region31: #{tpu_custom_call.1} parent=1 // pred_check_branch
      %69 = sbr.rel (0) target = $region33
    $region32: #{tpu_custom_call.1} parent=1 // pred_region
      %70 = dma.done [#allocation9], 2048
    $region33: #{tpu_custom_call.1} parent=1 // pred_fallthru
      _
    %v71 = vld [vmem:[#allocation2] sm:$0xff]
    %v72 = vld [vmem:[#allocation5] sm:$0xff]
    %v73 = vld [vmem:[#allocation5 + $0x8] sm:$0xff]
    %v74 = vld [vmem:[#allocation5 + $0x10] sm:$0xff]
    %v75 = vld [vmem:[#allocation5 + $0x18] sm:$0xff]
    %v76 = vld [vmem:[#allocation5 + $0x20] sm:$0xff]
    %v77 = vld [vmem:[#allocation5 + $0x28] sm:$0xff]
    %v78 = vld [vmem:[#allocation5 + $0x30] sm:$0xff]
    %v79 = vld [vmem:[#allocation5 + $0x38] sm:$0xff]
    %v80 = vld [vmem:[#allocation5 + $0x40] sm:$0xff]
    %v81 = vld [vmem:[#allocation5 + $0x48] sm:$0xff]
    %v82 = vld [vmem:[#allocation5 + $0x50] sm:$0xff]
    %v83 = vld [vmem:[#allocation5 + $0x58] sm:$0xff]
    %v84 = vld [vmem:[#allocation5 + $0x60] sm:$0xff]
    %v85 = vld [vmem:[#allocation5 + $0x68] sm:$0xff]
    %v86 = vld [vmem:[#allocation5 + $0x70] sm:$0xff]
    %v87 = vld [vmem:[#allocation5 + $0x78] sm:$0xff]
    %88 = vmatprep.subr.mxu0 0.0
    %89 = vmatpush1.xpose.msra.mxu0 %v72
    %90 = vmatprep.subr.mxu0 0.0
    %91 = vmatpush1.xpose.msra.mxu0 %v73
    %92 = vmatprep.subr.mxu0 0.0
    %93 = vmatpush1.xpose.msra.mxu0 %v74
    %94 = vmatprep.subr.mxu0 0.0
    %95 = vmatpush1.xpose.msra.mxu0 %v75
    %96 = vmatprep.subr.mxu0 0.0
    %97 = vmatpush1.xpose.msra.mxu0 %v76
    %98 = vmatprep.subr.mxu0 0.0
    %99 = vmatpush1.xpose.msra.mxu0 %v77
    %100 = vmatprep.subr.mxu0 0.0
    %101 = vmatpush1.xpose.msra.mxu0 %v78
    %102 = vmatprep.subr.mxu0 0.0
    %103 = vmatpush1.xpose.msra.mxu0 %v79
    %104 = vmatprep.subr.mxu0 0.0
    %105 = vmatpush1.xpose.msra.mxu0 %v80
    %106 = vmatprep.subr.mxu0 0.0
    %107 = vmatpush1.xpose.msra.mxu0 %v81
    %108 = vmatprep.subr.mxu0 0.0
    %109 = vmatpush1.xpose.msra.mxu0 %v82
    %110 = vmatprep.subr.mxu0 0.0
    %111 = vmatpush1.xpose.msra.mxu0 %v83
    %112 = vmatprep.subr.mxu0 0.0
    %113 = vmatpush1.xpose.msra.mxu0 %v84
    %114 = vmatprep.subr.mxu0 0.0
    %115 = vmatpush1.xpose.msra.mxu0 %v85
    %116 = vmatprep.subr.mxu0 0.0
    %117 = vmatpush1.xpose.msra.mxu0 %v86
    %118 = vmatprep.subr.mxu0 0.0
    %119 = vmatpush1.xpose.msra.mxu0 %v87
    %120 = vmatprep.subr.mxu0 0.0
    %121 = vmatpush1.xpose.msra.mxu0 0.0
    %122 = vmatprep.subr.mxu0 0.0
    %123 = vmatpush1.xpose.msra.mxu0 0.0
    %124 = vmatprep.subr.mxu0 0.0
    %125 = vmatpush1.xpose.msra.mxu0 0.0
    %126 = vmatprep.subr.mxu0 0.0
    %127 = vmatpush1.xpose.msra.mxu0 0.0
    %128 = vmatprep.subr.mxu0 0.0
    %129 = vmatpush1.xpose.msra.mxu0 0.0
    %130 = vmatprep.subr.mxu0 0.0
    %131 = vmatpush1.xpose.msra.mxu0 0.0
    %132 = vmatprep.subr.mxu0 0.0
    %133 = vmatpush1.xpose.msra.mxu0 0.0
    %134 = vmatprep.subr.mxu0 0.0
    %135 = vmatpush1.xpose.msra.mxu0 0.0
    %136 = vmatprep.subr.mxu0 0.0
    %137 = vmatpush1.xpose.msra.mxu0 0.0
    %138 = vmatprep.subr.mxu0 0.0
    %139 = vmatpush1.xpose.msra.mxu0 0.0
    %140 = vmatprep.subr.mxu0 0.0
    %141 = vmatpush1.xpose.msra.mxu0 0.0
    %142 = vmatprep.subr.mxu0 0.0
    %143 = vmatpush1.xpose.msra.mxu0 0.0
    %144 = vmatprep.subr.mxu0 0.0
    %145 = vmatpush1.xpose.msra.mxu0 0.0
    %146 = vmatprep.subr.mxu0 0.0
    %147 = vmatpush1.xpose.msra.mxu0 0.0
    %148 = vmatprep.subr.mxu0 0.0
    %149 = vmatpush1.xpose.msra.mxu0 0.0
    %150 = vmatprep.subr.mxu0 0.0
    %151 = vmatpush1.xpose.msra.mxu0 0.0
    %152 = vmatprep.mubr.f32.mxu0 0.0
    %153 = vmatmul.mubr.f32.gmra.mrb[0].mxu0 %v71
    %v154 = vpop.f32.mrb[0].mxu0
    %v155 = vadd.f32 0.0, %v154
    %v156 = vpop.f32.mrb[0].mxu0
    %157 = vdwg.mxu0
    %v158 = vld [vmem:[#allocation7] sm:$0xff]
    %v159 = vld [vmem:[#allocation7 + $0x8] sm:$0xff]
    %v160 = vld [vmem:[#allocation7 + $0x10] sm:$0xff]
    %v161 = vld [vmem:[#allocation7 + $0x18] sm:$0xff]
    %v162 = vld [vmem:[#allocation7 + $0x20] sm:$0xff]
    %v163 = vld [vmem:[#allocation7 + $0x28] sm:$0xff]
    %v164 = vld [vmem:[#allocation7 + $0x30] sm:$0xff]
    %v165 = vld [vmem:[#allocation7 + $0x38] sm:$0xff]
    %v166 = vld [vmem:[#allocation7 + $0x40] sm:$0xff]
    %v167 = vld [vmem:[#allocation7 + $0x48] sm:$0xff]
    %v168 = vld [vmem:[#allocation7 + $0x50] sm:$0xff]
    %v169 = vld [vmem:[#allocation7 + $0x58] sm:$0xff]
    %v170 = vld [vmem:[#allocation7 + $0x60] sm:$0xff]
    %v171 = vld [vmem:[#allocation7 + $0x68] sm:$0xff]
    %v172 = vld [vmem:[#allocation7 + $0x70] sm:$0xff]
    %v173 = vld [vmem:[#allocation7 + $0x78] sm:$0xff]
    %174 = vmatprep.subr.mxu0 0.0
    %175 = vmatpush1.xpose.msra.mxu0 %v158
    %176 = vmatprep.subr.mxu0 0.0
    %177 = vmatpush1.xpose.msra.mxu0 %v159
    %178 = vmatprep.subr.mxu0 0.0
    %179 = vmatpush1.xpose.msra.mxu0 %v160
    %180 = vmatprep.subr.mxu0 0.0
    %181 = vmatpush1.xpose.msra.mxu0 %v161
    %182 = vmatprep.subr.mxu0 0.0
    %183 = vmatpush1.xpose.msra.mxu0 %v162
    %184 = vmatprep.subr.mxu0 0.0
    %185 = vmatpush1.xpose.msra.mxu0 %v163
    %186 = vmatprep.subr.mxu0 0.0
    %187 = vmatpush1.xpose.msra.mxu0 %v164
    %188 = vmatprep.subr.mxu0 0.0
    %189 = vmatpush1.xpose.msra.mxu0 %v165
    %190 = vmatprep.subr.mxu0 0.0
    %191 = vmatpush1.xpose.msra.mxu0 %v166
    %192 = vmatprep.subr.mxu0 0.0
    %193 = vmatpush1.xpose.msra.mxu0 %v167
    %194 = vmatprep.subr.mxu0 0.0
    %195 = vmatpush1.xpose.msra.mxu0 %v168
    %196 = vmatprep.subr.mxu0 0.0
    %197 = vmatpush1.xpose.msra.mxu0 %v169
    %198 = vmatprep.subr.mxu0 0.0
    %199 = vmatpush1.xpose.msra.mxu0 %v170
    %200 = vmatprep.subr.mxu0 0.0
    %201 = vmatpush1.xpose.msra.mxu0 %v171
    %202 = vmatprep.subr.mxu0 0.0
    %203 = vmatpush1.xpose.msra.mxu0 %v172
    %204 = vmatprep.subr.mxu0 0.0
    %205 = vmatpush1.xpose.msra.mxu0 %v173
    %206 = vmatprep.subr.mxu0 0.0
    %207 = vmatpush1.xpose.msra.mxu0 0.0
    %208 = vmatprep.subr.mxu0 0.0
    %209 = vmatpush1.xpose.msra.mxu0 0.0
    %210 = vmatprep.subr.mxu0 0.0
    %211 = vmatpush1.xpose.msra.mxu0 0.0
    %212 = vmatprep.subr.mxu0 0.0
    %213 = vmatpush1.xpose.msra.mxu0 0.0
    %214 = vmatprep.subr.mxu0 0.0
    %215 = vmatpush1.xpose.msra.mxu0 0.0
    %216 = vmatprep.subr.mxu0 0.0
    %217 = vmatpush1.xpose.msra.mxu0 0.0
    %218 = vmatprep.subr.mxu0 0.0
    %219 = vmatpush1.xpose.msra.mxu0 0.0
    %220 = vmatprep.subr.mxu0 0.0
    %221 = vmatpush1.xpose.msra.mxu0 0.0
    %222 = vmatprep.subr.mxu0 0.0
    %223 = vmatpush1.xpose.msra.mxu0 0.0
    %224 = vmatprep.subr.mxu0 0.0
    %225 = vmatpush1.xpose.msra.mxu0 0.0
    %226 = vmatprep.subr.mxu0 0.0
    %227 = vmatpush1.xpose.msra.mxu0 0.0
    %228 = vmatprep.subr.mxu0 0.0
    %229 = vmatpush1.xpose.msra.mxu0 0.0
    %230 = vmatprep.subr.mxu0 0.0
    %231 = vmatpush1.xpose.msra.mxu0 0.0
    %232 = vmatprep.subr.mxu0 0.0
    %233 = vmatpush1.xpose.msra.mxu0 0.0
    %234 = vmatprep.subr.mxu0 0.0
    %235 = vmatpush1.xpose.msra.mxu0 0.0
    %236 = vmatprep.subr.mxu0 0.0
    %237 = vmatpush1.xpose.msra.mxu0 0.0
    %238 = vmatprep.mubr.f32.mxu0 0.0
    %239 = vmatmul.mubr.f32.gmra.mrb[0].mxu0 %v155
    %v240 = vpop.f32.mrb[0].mxu0
    %v241 = vadd.f32 0.0, %v240
    %v242 = vpop.f32.mrb[0].mxu0
    %243 = vdwg.mxu0
    %v244 = vld [vmem:[#allocation8] sm:$0xff]
    %v245 = vld [vmem:[#allocation8 + $0x8] sm:$0xff]
    %v246 = vld [vmem:[#allocation8 + $0x10] sm:$0xff]
    %v247 = vld [vmem:[#allocation8 + $0x18] sm:$0xff]
    %v248 = vld [vmem:[#allocation8 + $0x20] sm:$0xff]
    %v249 = vld [vmem:[#allocation8 + $0x28] sm:$0xff]
    %v250 = vld [vmem:[#allocation8 + $0x30] sm:$0xff]
    %v251 = vld [vmem:[#allocation8 + $0x38] sm:$0xff]
    %v252 = vld [vmem:[#allocation8 + $0x40] sm:$0xff]
    %v253 = vld [vmem:[#allocation8 + $0x48] sm:$0xff]
    %v254 = vld [vmem:[#allocation8 + $0x50] sm:$0xff]
    %v255 = vld [vmem:[#allocation8 + $0x58] sm:$0xff]
    %v256 = vld [vmem:[#allocation8 + $0x60] sm:$0xff]
    %v257 = vld [vmem:[#allocation8 + $0x68] sm:$0xff]
    %v258 = vld [vmem:[#allocation8 + $0x70] sm:$0xff]
    %v259 = vld [vmem:[#allocation8 + $0x78] sm:$0xff]
    %260 = vmatprep.subr.mxu0 0.0
    %261 = vmatpush1.xpose.msra.mxu0 %v244
    %262 = vmatprep.subr.mxu0 0.0
    %263 = vmatpush1.xpose.msra.mxu0 %v245
    %264 = vmatprep.subr.mxu0 0.0
    %265 = vmatpush1.xpose.msra.mxu0 %v246
    %266 = vmatprep.subr.mxu0 0.0
    %267 = vmatpush1.xpose.msra.mxu0 %v247
    %268 = vmatprep.subr.mxu0 0.0
    %269 = vmatpush1.xpose.msra.mxu0 %v248
    %270 = vmatprep.subr.mxu0 0.0
    %271 = vmatpush1.xpose.msra.mxu0 %v249
    %272 = vmatprep.subr.mxu0 0.0
    %273 = vmatpush1.xpose.msra.mxu0 %v250
    %274 = vmatprep.subr.mxu0 0.0
    %275 = vmatpush1.xpose.msra.mxu0 %v251
    %276 = vmatprep.subr.mxu0 0.0
    %277 = vmatpush1.xpose.msra.mxu0 %v252
    %278 = vmatprep.subr.mxu0 0.0
    %279 = vmatpush1.xpose.msra.mxu0 %v253
    %280 = vmatprep.subr.mxu0 0.0
    %281 = vmatpush1.xpose.msra.mxu0 %v254
    %282 = vmatprep.subr.mxu0 0.0
    %283 = vmatpush1.xpose.msra.mxu0 %v255
    %284 = vmatprep.subr.mxu0 0.0
    %285 = vmatpush1.xpose.msra.mxu0 %v256
    %286 = vmatprep.subr.mxu0 0.0
    %287 = vmatpush1.xpose.msra.mxu0 %v257
    %288 = vmatprep.subr.mxu0 0.0
    %289 = vmatpush1.xpose.msra.mxu0 %v258
    %290 = vmatprep.subr.mxu0 0.0
    %291 = vmatpush1.xpose.msra.mxu0 %v259
    %292 = vmatprep.subr.mxu0 0.0
    %293 = vmatpush1.xpose.msra.mxu0 0.0
    %294 = vmatprep.subr.mxu0 0.0
    %295 = vmatpush1.xpose.msra.mxu0 0.0
    %296 = vmatprep.subr.mxu0 0.0
    %297 = vmatpush1.xpose.msra.mxu0 0.0
    %298 = vmatprep.subr.mxu0 0.0
    %299 = vmatpush1.xpose.msra.mxu0 0.0
    %300 = vmatprep.subr.mxu0 0.0
    %301 = vmatpush1.xpose.msra.mxu0 0.0
    %302 = vmatprep.subr.mxu0 0.0
    %303 = vmatpush1.xpose.msra.mxu0 0.0
    %304 = vmatprep.subr.mxu0 0.0
    %305 = vmatpush1.xpose.msra.mxu0 0.0
    %306 = vmatprep.subr.mxu0 0.0
    %307 = vmatpush1.xpose.msra.mxu0 0.0
    %308 = vmatprep.subr.mxu0 0.0
    %309 = vmatpush1.xpose.msra.mxu0 0.0
    %310 = vmatprep.subr.mxu0 0.0
    %311 = vmatpush1.xpose.msra.mxu0 0.0
    %312 = vmatprep.subr.mxu0 0.0
    %313 = vmatpush1.xpose.msra.mxu0 0.0
    %314 = vmatprep.subr.mxu0 0.0
    %315 = vmatpush1.xpose.msra.mxu0 0.0
    %316 = vmatprep.subr.mxu0 0.0
    %317 = vmatpush1.xpose.msra.mxu0 0.0
    %318 = vmatprep.subr.mxu0 0.0
    %319 = vmatpush1.xpose.msra.mxu0 0.0
    %320 = vmatprep.subr.mxu0 0.0
    %321 = vmatpush1.xpose.msra.mxu0 0.0
    %322 = vmatprep.subr.mxu0 0.0
    %323 = vmatpush1.xpose.msra.mxu0 0.0
    %324 = vmatprep.mubr.f32.mxu0 0.0
    %325 = vmatmul.mubr.f32.gmra.mrb[0].mxu0 %v241
    %v326 = vpop.f32.mrb[0].mxu0
    %v327 = vadd.f32 0.0, %v326
    %v328 = vpop.f32.mrb[0].mxu0
    %329 = vdwg.mxu0
    %330 = vst [vmem:[#allocation10] sm:$0xff] %v327
    // Predicated region
    $region34: #{tpu_custom_call.1} parent=1 // pred_check
      _
    $region35: #{tpu_custom_call.1} parent=1 // pred_check_branch
      %332 = sbr.rel (0) target = $region37
    $region36: #{tpu_custom_call.1} parent=1 // pred_region
      %s334 = ssub.s32 128, 128
      %335 = vsyncadd [#allocation4], %s334
      %s337 = sshll.u32 [#allocation10], 4
      %s338 = int_to_ptr.vmem [resolvable:$true] %s337
      %340 = dma.vmem_to_hbm [thread:$0]  %s338, 128, %s4, [#allocation4]
    $region37: #{tpu_custom_call.1} parent=1 // pred_fallthru
      _
    // Predicated region
    $region38: #{tpu_custom_call.1} parent=1 // pred_check
      _
    $region39: #{tpu_custom_call.1} parent=1 // pred_check_branch
      %342 = sbr.rel (0) target = $region41
    $region40: #{tpu_custom_call.1} parent=1 // pred_region
      %343 = dma.done [#allocation4], 128
    $region41: #{tpu_custom_call.1} parent=1 // pred_fallthru
      _
    %344 = vsyncpa [#allocation3], 1
    %345 = vsyncpa [#allocation6], 1
    %346 = vsyncpa [#allocation9], 1
    %347 = vsyncpa [#allocation4], 1

</llo_original>
